<compile_context>
chip_gen: v5e
topology: v5e:2x2
jax: 0.10.0
libtpu: 0.0.40
codegen_flags: <defaults>
</compile_context>

<pallas_src>
import math

import jax
import jax.numpy as jnp
from jax import lax
from jax.experimental import pallas as pl
from jax.experimental.pallas import tpu as pltpu


def _quadruple(x):
    if isinstance(x, (tuple, list)):
        assert len(x) == 4
        return tuple(x)
    return (x,) * 4


def _round_up(x, m):
    return ((x + m - 1) // m) * m


def _ds(start, size, stride):
    return pl.ds(start, size) if stride == 1 else pl.ds(start, size, stride)


def _vmem_limit_bytes():
    # ~5/8 of physical VMEM: ~40 MiB on v7x (64 MiB), ~80 MiB on v5e/v6e (128 MiB).
    try:
        cap = int(pltpu.get_tpu_info().vmem_capacity_bytes)
    except Exception:
        cap = 64 * 1024 * 1024   # conservative fallback (v7x per-core VMEM)
    return min(cap * 5 // 8, 100 * 1024 * 1024)


# ---------------------------------------------------------------------------
# FAST PATH: patch-embed (stride == kernel_size, dilation == 1)
# ---------------------------------------------------------------------------
def _patch_embed_kernel(a_ref, w_ref, b_ref, o_ref):
    # One MXU matmul over the FULL K = lk*dk*hk*wk*C contraction; bias fused
    # into the store. bf16 operands, f32 accumulation/output.
    o_ref[...] = (jnp.dot(a_ref[...], w_ref[...],
                          preferred_element_type=jnp.float32)
                  + b_ref[...]).astype(o_ref.dtype)


def conv4d_patch_embed_pallas(a, w_kco, bias_row, *, tile_m):
    """a: (B, Lo, Mp, K) bf16; w_kco: (K, Co) bf16; bias_row: (1, Co) f32."""
    B, Lo, Mp, K = a.shape
    Co = w_kco.shape[-1]
    return pl.pallas_call(
        _patch_embed_kernel,
        out_shape=jax.ShapeDtypeStruct((B, Lo, Mp, Co), jnp.float32),
        grid_spec=pltpu.PrefetchScalarGridSpec(
            num_scalar_prefetch=0,
            grid=(B, Lo, Mp // tile_m),
            in_specs=[
                # Lane-dense A tile: last dim is the full K contraction.
                pl.BlockSpec((None, None, tile_m, K),
                             lambda b, lo, m: (b, lo, m, 0)),
                # Constant block index -> full weight DMA'd once, VMEM-resident.
                pl.BlockSpec((K, Co), lambda b, lo, m: (0, 0)),
                pl.BlockSpec((1, Co), lambda b, lo, m: (0, 0)),
            ],
            out_specs=pl.BlockSpec((None, None, tile_m, Co),
                                   lambda b, lo, m: (b, lo, m, 0)),
        ),
        compiler_params=pltpu.CompilerParams(
            dimension_semantics=("parallel", "parallel", "parallel"),
            vmem_limit_bytes=_vmem_limit_bytes(),
        ),
    )(a, w_kco, bias_row)


# ---------------------------------------------------------------------------
# GENERAL PATH: any stride / dilation / padding
# ---------------------------------------------------------------------------
def conv4d_general_pallas(xp, w_r, bias_row, *, out_dims, kernel_size, stride,
                          dilation):
    """General 4-D convolution.

    xp:       (B, Lp, Dp, Hp, Wp, C)   bf16, spatially zero-padded, channel-last
    w_r:      (lk, dk, hk, wk, C, Co)  bf16
    bias_row: (1, Co)                  f32
    returns:  (B, Lo, Do*Ho*Wo, Co)    f32
    """
    B, Lp, Dp, Hp, Wp, C = xp.shape
    Co = w_r.shape[-1]
    Lo, Do, Ho, Wo = out_dims
    lk, dk, hk, wk = kernel_size
    ls, dstr, hs, ws = stride
    ld, dd, hd, wd = dilation
    DHW = Do * Ho * Wo

    # TODO(synk): for padded planes that exceed VMEM, tile Do/Ho with halos via
    # manual make_async_copy; also fold the d/h/w taps into one matmul and keep
    # an L-plane ring buffer so each plane is fetched once when ls < lk.

    def kernel(x_ref, w_ref, b_ref, o_ref):
        il = pl.program_id(2)

        @pl.when(il == 0)
        def _zero():
            o_ref[...] = jnp.zeros_like(o_ref)

        # d/h/w taps: in-VMEM window slices of the resident padded plane, each
        # feeding one MXU matmul (bf16 in, f32 accumulate).
        contrib = None
        for idd in range(dk):
            for ih in range(hk):
                for iw in range(wk):
                    win = x_ref[_ds(idd * dd, Do, dstr),
                                _ds(ih * hd, Ho, hs),
                                _ds(iw * wd, Wo, ws), :]          # (Do,Ho,Wo,C)
                    a = win.reshape(DHW, C)
                    part = jnp.dot(a, w_ref[idd, ih, iw],          # (C, Co)
                                   preferred_element_type=jnp.float32)
                    contrib = part if contrib is None else contrib + part

        # Accumulate directly into the VMEM-resident f32 output block (no acc
        # scratch: the output block index is constant across the il axis).
        o_ref[...] += contrib

        @pl.when(il == lk - 1)
        def _finish():
            o_ref[...] += b_ref[...]

    return pl.pallas_call(
        kernel,
        out_shape=jax.ShapeDtypeStruct((B, Lo, DHW, Co), jnp.float32),
        grid_spec=pltpu.PrefetchScalarGridSpec(
            num_scalar_prefetch=0,
            grid=(B, Lo, lk),
            in_specs=[
                # One padded L-plane of the channel-last input per grid step.
                pl.BlockSpec(
                    (None, None, Dp, Hp, Wp, C),
                    lambda b, lo, il: (b, lo * ls + il * ld, 0, 0, 0, 0)),
                # Weight slice for the current l-offset (tiny, VMEM-resident).
                pl.BlockSpec(
                    (None, dk, hk, wk, C, Co),
                    lambda b, lo, il: (il, 0, 0, 0, 0, 0)),
                # Bias row: constant block index -> loaded once, stays resident.
                pl.BlockSpec((1, Co), lambda b, lo, il: (0, 0)),
            ],
            out_specs=pl.BlockSpec(
                (None, None, DHW, Co),
                lambda b, lo, il: (b, lo, 0, 0)),
        ),
        compiler_params=pltpu.CompilerParams(
            dimension_semantics=("parallel", "parallel", "arbitrary"),
            vmem_limit_bytes=_vmem_limit_bytes(),
        ),
    )(xp, w_r, bias_row)


# ---------------------------------------------------------------------------
# Module wrapper (mirrors the PyTorch Conv4d forward semantics)
# ---------------------------------------------------------------------------
class Conv4d:
    def __init__(self, in_channels, out_channels, kernel_size,
                 stride=(1, 1, 1, 1), padding=(0, 0, 0, 0),
                 dilation=(1, 1, 1, 1), groups=1, bias=False,
                 padding_mode='zeros', *, key):
        kernel_size = _quadruple(kernel_size)
        stride = _quadruple(stride)
        padding = _quadruple(padding)
        dilation = _quadruple(dilation)
        assert groups == 1, 'Groups other than 1 not yet implemented!'
        assert padding_mode == 'zeros'
        self.in_channels = in_channels
        self.out_channels = out_channels
        self.kernel_size = kernel_size
        self.stride = stride
        self.padding = padding
        self.dilation = dilation

        # kaiming_uniform_(a=sqrt(5)) == U(-1/sqrt(fan_in), 1/sqrt(fan_in))
        fan_in = in_channels * math.prod(kernel_size)
        bound = 1.0 / math.sqrt(fan_in)
        wkey, bkey = jax.random.split(key)
        self.weight = jax.random.uniform(
            wkey, (out_channels, in_channels) + kernel_size,
            minval=-bound, maxval=bound, dtype=jnp.float32)
        if bias:
            self.bias = jax.random.uniform(
                bkey, (out_channels,), minval=-bound, maxval=bound,
                dtype=jnp.float32)
        else:
            self.bias = None

    def __call__(self, x):
        B, Cin, L, D, H, W = x.shape
        Co = self.out_channels
        lk, dk, hk, wk = self.kernel_size
        lp, dp, hp, wp = self.padding
        ld, dd, hd, wd = self.dilation
        ls, dstr, hs, ws = self.stride

        Lo = (L + 2 * lp - lk - (lk - 1) * (ld - 1)) // ls + 1
        Do = (D + 2 * dp - dk - (dk - 1) * (dd - 1)) // dstr + 1
        Ho = (H + 2 * hp - hk - (hk - 1) * (hd - 1)) // hs + 1
        Wo = (W + 2 * wp - wk - (wk - 1) * (wd - 1)) // ws + 1

        # channel-last + spatial zero-pad (one pass over the raw input).
        x_cl = jnp.transpose(x, (0, 2, 3, 4, 5, 1))               # (B,L,D,H,W,C)
        xp = jnp.pad(x_cl, ((0, 0), (lp, lp), (dp, dp), (hp, hp), (wp, wp),
                            (0, 0)))

        if self.bias is not None:
            bias_row = self.bias.reshape(1, Co).astype(jnp.float32)
        else:
            bias_row = jnp.zeros((1, Co), jnp.float32)

        fast = (tuple(self.stride) == tuple(self.kernel_size)
                and tuple(self.dilation) == (1, 1, 1, 1))

        if fast:
            # -- patch-embed fast path: lossless tap-pack + one fused matmul --
            M = Do * Ho * Wo
            K = lk * dk * hk * wk * Cin
            xp = xp[:, :Lo * lk, :Do * dk, :Ho * hk, :Wo * wk, :]
            a = xp.reshape(B, Lo, lk, Do, dk, Ho, hk, Wo, wk, Cin)
            a = jnp.transpose(a, (0, 1, 3, 5, 7, 2, 4, 6, 8, 9))
            a = a.reshape(B, Lo, M, K).astype(jnp.bfloat16)

            tile_m = 256 if M >= 256 else _round_up(M, 8)
            Mp = _round_up(M, tile_m)
            if Mp != M:
                a = jnp.pad(a, ((0, 0), (0, 0), (0, Mp - M), (0, 0)))

            # (Co, C, lk, dk, hk, wk) -> (lk, dk, hk, wk, C, Co) -> (K, Co),
            # matching A's K ordering.
            w_kco = jnp.transpose(self.weight, (2, 3, 4, 5, 1, 0)) \
                       .reshape(K, Co).astype(jnp.bfloat16)

            out = conv4d_patch_embed_pallas(a, w_kco, bias_row, tile_m=tile_m)
            out = out[:, :, :M, :]                                # (B,Lo,M,Co)
        else:
            # -- general path --
            xp = xp.astype(jnp.bfloat16)
            w_r = jnp.transpose(self.weight, (2, 3, 4, 5, 1, 0)) \
                     .astype(jnp.bfloat16)                        # (lk,dk,hk,wk,C,Co)
            out = conv4d_general_pallas(
                xp, w_r, bias_row,
                out_dims=(Lo, Do, Ho, Wo),
                kernel_size=self.kernel_size,
                stride=self.stride,
                dilation=self.dilation)                           # (B,Lo,DHW,Co)

        out = out.reshape(B, Lo, Do, Ho, Wo, Co)
        out = jnp.transpose(out, (0, 5, 1, 2, 3, 4))              # (B,Co,Lo,Do,Ho,Wo)
        return out


# ---------------------------------------------------------------------------
# Reference 4-D conv via lax.conv_general_dilated (independent correctness check)
# ---------------------------------------------------------------------------
def conv4d_reference(x, weight, stride, padding, dilation):
    return lax.conv_general_dilated(
        x, weight,
        window_strides=stride,
        padding=[(p, p) for p in padding],
        rhs_dilation=dilation,
        dimension_numbers=('NCLDHW', 'OILDHW', 'NCLDHW'))


if __name__ == "__main__":
    key = jax.random.PRNGKey(0)
    k1x, k1w, k2x, k2w = jax.random.split(key, 4)

    # --- Test 1: canglong patch-embed configuration (fast path) -------------
    B, C_in, C_out = 2, 4, 128
    L, D, H, W = 4, 8, 32, 32
    kernel = (2, 2, 4, 4)
    stride = (2, 2, 4, 4)
    padding = (0, 0, 0, 0)
    dilation = (1, 1, 1, 1)

    x = jax.random.normal(k1x, (B, C_in, L, D, H, W), dtype=jnp.float32)
    conv = Conv4d(C_in, C_out, kernel, stride=stride, padding=padding,
                  dilation=dilation, bias=True, key=k1w)
    out = jax.block_until_ready(conv(x))
    ref = conv4d_reference(x, conv.weight, stride, padding, dilation)
    ref = ref + conv.bias.reshape(1, -1, 1, 1, 1, 1)
    ref = jax.block_until_ready(ref)
    assert out.shape == ref.shape, (out.shape, ref.shape)
    err1 = float(jnp.max(jnp.abs(out - ref)))
    assert jnp.allclose(out, ref, atol=3e-2, rtol=3e-2), err1

    # --- Test 2: general overlapping-window configuration (general path) ----
    B, C_in, C_out = 2, 4, 8
    L, D, H, W = 6, 5, 8, 8
    kernel = (2, 2, 3, 3)
    stride = (1, 1, 1, 1)
    padding = (0, 0, 1, 1)
    dilation = (1, 1, 1, 1)

    x = jax.random.normal(k2x, (B, C_in, L, D, H, W), dtype=jnp.float32)
    conv = Conv4d(C_in, C_out, kernel, stride=stride, padding=padding,
                  dilation=dilation, bias=True, key=k2w)
    out = jax.block_until_ready(conv(x))
    ref = conv4d_reference(x, conv.weight, stride, padding, dilation)
    ref = ref + conv.bias.reshape(1, -1, 1, 1, 1, 1)
    ref = jax.block_until_ready(ref)
    assert out.shape == ref.shape, (out.shape, ref.shape)
    err2 = float(jnp.max(jnp.abs(out - ref)))
    assert jnp.allclose(out, ref, atol=2e-2, rtol=2e-2), err2

    print("KERNEL_OK")
</pallas_src>

<mosaic_0001>
module attributes {stable_mosaic.version = 11 : i64} {
  func.func @_patch_embed_kernel(%arg0: i32, %arg1: i32, %arg2: i32, %arg3: memref<1x1x256x256xbf16, #tpu.memory_space<vmem>>, %arg4: memref<256x128xbf16, #tpu.memory_space<vmem>>, %arg5: memref<1x128xf32, #tpu.memory_space<vmem>>, %arg6: memref<1x1x256x128xf32, #tpu.memory_space<vmem>>) attributes {dimension_semantics = [#tpu.dimension_semantics<parallel>, #tpu.dimension_semantics<parallel>, #tpu.dimension_semantics<parallel>], iteration_bounds = array<i64: 2, 2, 1>, scalar_prefetch = 0 : i64, scratch_operands = 0 : i64, tpu.core_type = #tpu.core_type<tc>, window_params = [{transform_indices = @transform_0, window_bounds = array<i64: 1, 1, 256, 256>}, {pipeline_mode = #tpu.pipeline_mode<synchronous>, transform_indices = @transform_1, window_bounds = array<i64: 256, 128>}, {pipeline_mode = #tpu.pipeline_mode<synchronous>, transform_indices = @transform_2, window_bounds = array<i64: 1, 128>}, {transform_indices = @transform_3, window_bounds = array<i64: 1, 1, 256, 128>}]} {
    %c0 = arith.constant 0 : index
    %c0_0 = arith.constant 0 : index
    %c0_1 = arith.constant 0 : index
    %c0_2 = arith.constant 0 : index
    %0 = vector.load %arg3[%c0, %c0_0, %c0_1, %c0_2] : memref<1x1x256x256xbf16, #tpu.memory_space<vmem>>, vector<1x1x256x256xbf16>
    %1 = vector.shape_cast %0 : vector<1x1x256x256xbf16> to vector<256x256xbf16>
    %c0_3 = arith.constant 0 : index
    %c0_4 = arith.constant 0 : index
    %2 = vector.load %arg4[%c0_3, %c0_4] : memref<256x128xbf16, #tpu.memory_space<vmem>>, vector<256x128xbf16>
    %cst = arith.constant dense<0.000000e+00> : vector<256x128xf32>
    %3 = tpu.matmul %1, %2, %cst {dimension_numbers = #tpu.dot_dimension_numbers<[1], [0], [0], [1], [0, 0, 1, 1], [], []>} : vector<256x256xbf16>, vector<256x128xbf16>, vector<256x128xf32> -> vector<256x128xf32>
    %c0_5 = arith.constant 0 : index
    %c0_6 = arith.constant 0 : index
    %4 = vector.load %arg5[%c0_5, %c0_6] : memref<1x128xf32, #tpu.memory_space<vmem>>, vector<1x128xf32>
    %5 = vector.broadcast %4 : vector<1x128xf32> to vector<256x128xf32>
    %6 = arith.addf %3, %5 : vector<256x128xf32>
    %c0_7 = arith.constant 0 : index
    %c0_8 = arith.constant 0 : index
    %c0_9 = arith.constant 0 : index
    %c0_10 = arith.constant 0 : index
    %7 = vector.load %arg6[%c0_7, %c0_8, %c0_9, %c0_10] : memref<1x1x256x128xf32, #tpu.memory_space<vmem>>, vector<1x1x256x128xf32>
    %8 = vector.shape_cast %7 : vector<1x1x256x128xf32> to vector<256x128xf32>
    %9 = vector.shape_cast %6 : vector<256x128xf32> to vector<1x1x256x128xf32>
    tpu.vector_store %arg6[%c0_7, %c0_8, %c0_9, %c0_10], %9 {strides = array<i32>} : memref<1x1x256x128xf32, #tpu.memory_space<vmem>>, vector<1x1x256x128xf32>,
    return
  }
  func.func @transform_0(%arg0: i32, %arg1: i32, %arg2: i32) -> (i32, i32, i32, i32) {
    %c0_i32 = arith.constant 0 : i32
    %c0_i32_0 = arith.constant 0 : i32
    return %arg0, %arg1, %arg2, %c0_i32 : i32, i32, i32, i32
  }
  func.func @transform_1(%arg0: i32, %arg1: i32, %arg2: i32) -> (i32, i32) {
    %c0_i32 = arith.constant 0 : i32
    %c0_i32_0 = arith.constant 0 : i32
    %c0_i32_1 = arith.constant 0 : i32
    return %c0_i32, %c0_i32_0 : i32, i32
  }
  func.func @transform_2(%arg0: i32, %arg1: i32, %arg2: i32) -> (i32, i32) {
    %c0_i32 = arith.constant 0 : i32
    %c0_i32_0 = arith.constant 0 : i32
    %c0_i32_1 = arith.constant 0 : i32
    return %c0_i32, %c0_i32_0 : i32, i32
  }
  func.func @transform_3(%arg0: i32, %arg1: i32, %arg2: i32) -> (i32, i32, i32, i32) {
    %c0_i32 = arith.constant 0 : i32
    %c0_i32_0 = arith.constant 0 : i32
    return %arg0, %arg1, %arg2, %c0_i32 : i32, i32, i32, i32
  }
}

</mosaic_0001>

<llo_original>
// kernel: tpu_custom_call.1
$region0: #{tpu_custom_call.1}
  #allocation0 [shape = 'u32[]', space=smem, size = 0x4, offset = 0x4, fixed_abs, tag = 'smem constant byte address 0x4 - core index']
  #allocation1 [shape = 'u32[72,128]{1,0:T(1,128)}', space=vmem, size = 0x9000, scoped, tag = 'internal scratch']
  %s0 = inlined_call_operand.hbm [shape: bf16[2,2,256,256], index: 0, kind: input, shape index: {}]
  %s1 = inlined_call_operand.hbm [shape: bf16[256,128], index: 1, kind: input, shape index: {}]
  %s2 = inlined_call_operand.vmem [shape: f32[1,128], index: 2, kind: input, shape index: {}]
  %s3 = inlined_call_operand.hbm [shape: f32[2,2,256,128], index: 3, kind: output, shape index: {}]
  %s4 = sld [smem:[#allocation0]]
  $region53: #{tpu_custom_call.1} parent=0
    _
  %s6 = ssub.s32 1, %s4
  %s7 = scalar_select 0, %s6, %s4
  $region1: #{tpu_custom_call.1} parent=0
    #allocation2 [shape = 'u8[262144]{0}', space=vmem, size = 0x40000, scoped, tag = 'input window, operand 0']
    #allocation3 [shape = 's32[2]{0}', space=sflag, size = 0x8, scoped, tag = 'scoped memory for tpu_custom_call.1']
    #allocation4 [shape = 's32[2]{0}', space=sflag, size = 0x8, scoped, tag = 'scoped memory for tpu_custom_call.1']
    #allocation5 [shape = 'u8[65536]{0}', space=vmem, size = 0x10000, scoped, tag = 'input window, operand 1, single buffered']
    #allocation6 [shape = 's32[1]{0}', space=sflag, size = 0x4, scoped, tag = 'scoped memory for tpu_custom_call.1']
    #allocation7 [shape = 'u8[262144]{0}', space=vmem, size = 0x40000, scoped, tag = 'output window, operand 0']
    %8 = vsyncpa [#allocation3], 0
    %s9 = scalar_lea.sflag [#allocation3], 1
    %10 = vsyncpa %s9, 0
    %11 = vsyncpa [#allocation6], 0
    %12 = vsyncpa [#allocation4], 0
    %s13 = scalar_lea.sflag [#allocation4], 1
    %14 = vsyncpa %s13, 0
    loop: start=0, step=1, limit=6
    $region2: #{tpu_custom_call.1} parent=1 // loop_pre_header
      _
    $region3: #{tpu_custom_call.1} parent=1 // loop_header
      %s16 = sphi 0, %s20
      %p17 = scmp.ge.s32.totalorder %s16, 6
      %s23 = sphi 0, %s42
      %s24 = sphi 0, %s38
      %s25 = sphi 0, %s34
      %s26 = sphi 0, %s23
      %s27 = sphi 0, %s24
      %s28 = sphi 0, %s25
      %s29 = sphi 0, %s26
      %s30 = sphi 0, %s27
      %s31 = sphi 0, %s28
      %s49 = sphi 0, %s51
      %s52 = sphi 0, %s49
      %s53 = sphi 0, %s52
      %s69 = sphi 0, %s53
      %s73 = sphi 0, %s73
      %s75 = sphi 0, %s73
      %s76 = sphi 0, %s75
      %s90 = sphi 0, %s76
      %s94 = sphi 0, %s94
      %s96 = sphi 0, %s94
      %s97 = sphi 0, %s96
      %s111 = sphi 0, %s97
      %s121 = sphi 0, %s123
      %s124 = sphi 0, %s121
      %s125 = sphi 0, %s124
      %s141 = sphi 0, %s125
    $region4: #{tpu_custom_call.1} parent=1 // loop_header_branch
      %19 = sbr.rel (%p17) target = $region8
    $region5: #{tpu_custom_call.1} parent=1 // loop_body
      %s21 = ssub.s32 %s16, 1
      %s22 = ssub.s32 %s16, 2
      %s32 = sadd.s32 1, %s25
      %p33 = scmp.ge.s32.totalorder %s32, 1
      %s34 = scalar_select %p33, 0, %s32
      %s35 = sadd.s32 1, %s24
      %s36 = scalar_select %p33, %s35, %s24
      %p37 = scmp.ge.s32.totalorder %s36, 2
      %s38 = scalar_select %p37, 0, %s36
      %s39 = sadd.s32 1, %s23
      %s40 = scalar_select %p37, %s39, %s23
      %p41 = scmp.ge.s32.totalorder %s40, 2
      %s42 = scalar_select %p41, 0, %s40
      %s43 = ssub.s32 %s23, %s42
      %s44 = ssub.s32 %s24, %s38
      %s45 = sor.u32 %s43, %s44
      %s46 = ssub.s32 %s25, %s34
      %s47 = sor.u32 %s45, %s46
      %p48 = scmp.eq.s32.totalorder %s47, 0
      %s50 = sadd.s32 %s49, 1
      %s51 = scalar_select %p48, %s49, %s50
      %p54 = pneg %p48
      %p55 = scmp.eq.s32.totalorder %s16, 3
      %p56 = por %p54, %p55
      %p57 = scmp.ne.s32.totalorder %s49, %s52
      %p58 = scmp.eq.s32.totalorder %s16, 0
      %p59 = por %p57, %p58
      %p60 = scmp.ne.s32.totalorder %s49, %s52
      %p61 = scmp.eq.s32.totalorder %s21, 3
      %p62 = por %p60, %p61
      %p63 = scmp.ne.s32.totalorder %s52, %s53
      %p64 = scmp.eq.s32.totalorder %s21, 0
      %p65 = por %p63, %p64
      %p66 = scmp.ne.s32.totalorder %s52, %s53
      %p67 = scmp.eq.s32.totalorder %s22, 3
      %p68 = por %p66, %p67
      %p70 = scmp.ne.s32.totalorder %s53, %s69
      %p71 = scmp.eq.s32.totalorder %s22, 0
      %p72 = por %p70, %p71
      %s74 = sadd.s32 %s73, 1
      %p77 = scmp.eq.s32.totalorder %s16, 3
      %p78 = scmp.ne.s32.totalorder %s73, %s75
      %p79 = scmp.eq.s32.totalorder %s16, 0
      %p80 = por %p78, %p79
      %p81 = scmp.ne.s32.totalorder %s73, %s75
      %p82 = scmp.eq.s32.totalorder %s21, 3
      %p83 = por %p81, %p82
      %p84 = scmp.ne.s32.totalorder %s75, %s76
      %p85 = scmp.eq.s32.totalorder %s21, 0
      %p86 = por %p84, %p85
      %p87 = scmp.ne.s32.totalorder %s75, %s76
      %p88 = scmp.eq.s32.totalorder %s22, 3
      %p89 = por %p87, %p88
      %p91 = scmp.ne.s32.totalorder %s76, %s90
      %p92 = scmp.eq.s32.totalorder %s22, 0
      %p93 = por %p91, %p92
      %s95 = sadd.s32 %s94, 1
      %p98 = scmp.eq.s32.totalorder %s16, 3
      %p99 = scmp.ne.s32.totalorder %s94, %s96
      %p100 = scmp.eq.s32.totalorder %s16, 0
      %p101 = por %p99, %p100
      %p102 = scmp.ne.s32.totalorder %s94, %s96
      %p103 = scmp.eq.s32.totalorder %s21, 3
      %p104 = por %p102, %p103
      %p105 = scmp.ne.s32.totalorder %s96, %s97
      %p106 = scmp.eq.s32.totalorder %s21, 0
      %p107 = por %p105, %p106
      %p108 = scmp.ne.s32.totalorder %s96, %s97
      %p109 = scmp.eq.s32.totalorder %s22, 3
      %p110 = por %p108, %p109
      %p112 = scmp.ne.s32.totalorder %s97, %s111
      %p113 = scmp.eq.s32.totalorder %s22, 0
      %p114 = por %p112, %p113
      %s115 = ssub.s32 %s23, %s42
      %s116 = ssub.s32 %s24, %s38
      %s117 = sor.u32 %s115, %s116
      %s118 = ssub.s32 %s25, %s34
      %s119 = sor.u32 %s117, %s118
      %p120 = scmp.eq.s32.totalorder %s119, 0
      %s122 = sadd.s32 %s121, 1
      %s123 = scalar_select %p120, %s121, %s122
      %p126 = pneg %p120
      %p127 = scmp.eq.s32.totalorder %s16, 3
      %p128 = por %p126, %p127
      %p129 = scmp.ne.s32.totalorder %s121, %s124
      %p130 = scmp.eq.s32.totalorder %s16, 0
      %p131 = por %p129, %p130
      %p132 = scmp.ne.s32.totalorder %s121, %s124
      %p133 = scmp.eq.s32.totalorder %s21, 3
      %p134 = por %p132, %p133
      %p135 = scmp.ne.s32.totalorder %s124, %s125
      %p136 = scmp.eq.s32.totalorder %s21, 0
      %p137 = por %p135, %p136
      %p138 = scmp.ne.s32.totalorder %s124, %s125
      %p139 = scmp.eq.s32.totalorder %s22, 3
      %p140 = por %p138, %p139
      %p142 = scmp.ne.s32.totalorder %s125, %s141
      %p143 = scmp.eq.s32.totalorder %s22, 0
      %p144 = por %p142, %p143
      %p145 = scmp.le.s32.totalorder 1, %s16
      %p146 = scmp.lt.s32.totalorder %s16, 5
      %p147 = pnand %p145, %p146
      %p148 = pneg %p147
      // Predicated region
      $region9: #{tpu_custom_call.1} parent=5 // pred_check
        _
      $region10: #{tpu_custom_call.1} parent=5 // pred_check_branch
        %150 = sbr.rel (%p147) target = $region12
      $region11: #{tpu_custom_call.1} parent=5 // pred_region
        %s151 = ssub.s32 %s16, 1
        // Predicated region
        $region13: #{tpu_custom_call.1} parent=11 // pred_check
          %p152 = pneg %p86
        $region14: #{tpu_custom_call.1} parent=11 // pred_check_branch
          %154 = sbr.rel (%p152) target = $region16
        $region15: #{tpu_custom_call.1} parent=11 // pred_region
          %156 = vsyncadd [#allocation6], 0
          %s157 = sshll.u32 %s1, 4
          %s158 = int_to_ptr.hbm [resolvable:$true] %s157
          %s159 = sshll.u32 [#allocation5], 4
          %s160 = int_to_ptr.vmem [resolvable:$true] %s159
          %165 = dma.hbm_to_vmem [thread:$0]  %s158, 2048, %s160, [#allocation6], 64, 64, 4
        $region16: #{tpu_custom_call.1} parent=11 // pred_fallthru
          _
        // Predicated region
        $region17: #{tpu_custom_call.1} parent=11 // pred_check
          %p166 = pneg %p107
        $region18: #{tpu_custom_call.1} parent=11 // pred_check_branch
          %168 = sbr.rel (%p166) target = $region20
        $region19: #{tpu_custom_call.1} parent=11 // pred_region
          _
        $region20: #{tpu_custom_call.1} parent=11 // pred_fallthru
          _
      $region12: #{tpu_custom_call.1} parent=5 // pred_fallthru
        _
      %p169 = scmp.lt.s32.totalorder %s16, 4
      // Predicated region
      $region21: #{tpu_custom_call.1} parent=5 // pred_check
        %p170 = pneg %p169
      $region22: #{tpu_custom_call.1} parent=5 // pred_check_branch
        %172 = sbr.rel (%p170) target = $region24
      $region23: #{tpu_custom_call.1} parent=5 // pred_region
        // Predicated region
        $region25: #{tpu_custom_call.1} parent=23 // pred_check
          %p173 = pneg %p59
        $region26: #{tpu_custom_call.1} parent=23 // pred_check_branch
          %175 = sbr.rel (%p173) target = $region28
        $region27: #{tpu_custom_call.1} parent=23 // pred_region
          %s176 = sand.u32 %s49, 1
          %s177 = scalar_lea.sflag [#allocation3], %s176
          %s178 = sand.u32 %s49, 1
          %s179 = smul.addr %s178, 256
          %s180 = scalar_lea.vmem [#allocation2], %s179
          %s181 = smul.u32 32, %s25
          %183 = vsyncadd %s177, 0
          %s184 = smul.addr %s181, 2
          %s185 = smul.addr %s24, 64
          %s186 = sadd.s32 %s184, %s185
          %s187 = smul.addr %s23, 128
          %s188 = sadd.s32 %s186, %s187
          %s189 = smul.addr %s188, 4
          %s190 = scalar_lea.hbm %s0, %s189
          %s191 = sshll.u32 %s190, 4
          %s192 = int_to_ptr.hbm [resolvable:$true] %s191
          %s193 = sshll.u32 %s180, 4
          %s194 = int_to_ptr.vmem [resolvable:$true] %s193
          %199 = dma.hbm_to_vmem [thread:$0]  %s192, 4096, %s194, %s177, 128, 128, 8
        $region28: #{tpu_custom_call.1} parent=23 // pred_fallthru
          _
      $region24: #{tpu_custom_call.1} parent=5 // pred_fallthru
        _
      %p200 = scmp.le.s32.totalorder 1, %s16
      %p201 = scmp.lt.s32.totalorder %s16, 5
      %p202 = pnand %p200, %p201
      %p203 = pneg %p202
      // Predicated region
      $region29: #{tpu_custom_call.1} parent=5 // pred_check
        _
      $region30: #{tpu_custom_call.1} parent=5 // pred_check_branch
        %205 = sbr.rel (%p202) target = $region32
      $region31: #{tpu_custom_call.1} parent=5 // pred_region
        %s206 = ssub.s32 %s16, 1
        %s207 = sand.u32 %s52, 1
        %s208 = scalar_lea.sflag [#allocation3], %s207
        %s209 = sand.u32 %s52, 1
        %s210 = smul.addr %s209, 256
        %s211 = scalar_lea.vmem [#allocation2], %s210
        // Predicated region
        $region33: #{tpu_custom_call.1} parent=31 // pred_check
          %p212 = pneg %p65
        $region34: #{tpu_custom_call.1} parent=31 // pred_check_branch
          %214 = sbr.rel (%p212) target = $region36
        $region35: #{tpu_custom_call.1} parent=31 // pred_region
          %216 = dma.done %s208, 4096
        $region36: #{tpu_custom_call.1} parent=31 // pred_fallthru
          _
        // Predicated region
        $region37: #{tpu_custom_call.1} parent=31 // pred_check
          %p217 = pneg %p86
        $region38: #{tpu_custom_call.1} parent=31 // pred_check_branch
          %219 = sbr.rel (%p217) target = $region40
        $region39: #{tpu_custom_call.1} parent=31 // pred_region
          %221 = dma.done [#allocation6], 2048
        $region40: #{tpu_custom_call.1} parent=31 // pred_fallthru
          _
        %s222 = sand.u32 %s52, 1
        %s223 = scalar_lea.sflag [#allocation3], %s222
        %s224 = sand.u32 %s52, 1
        %s225 = smul.addr %s224, 256
        %s226 = scalar_lea.vmem [#allocation2], %s225
        %p227 = pneg %p65
        %p228 = pneg %p62
        %p229 = pneg %p86
        %p230 = pneg %p83
        %p231 = pneg %p107
        %p232 = pneg %p104
        %p233 = pneg %p137
        %p234 = pneg %p134
        %s235 = sand.u32 %s124, 1
        %s236 = scalar_lea.sflag [#allocation4], %s235
        %s237 = sand.u32 %s124, 1
        %s238 = smul.addr %s237, 256
        %s239 = scalar_lea.vmem [#allocation7], %s238
        %s240 = smul.u32 32, %s28
        %s241 = smul.u32 32, %s28
        %v242 = vld [vmem:[%s211] sm:$0xff]
        %v243 = vld [vmem:[%s211 + $0x8] sm:$0xff]
        %v244 = vld [vmem:[%s211 + $0x10] sm:$0xff]
        %v245 = vld [vmem:[%s211 + $0x18] sm:$0xff]
        %v246 = vld [vmem:[%s211 + $0x20] sm:$0xff]
        %v247 = vld [vmem:[%s211 + $0x28] sm:$0xff]
        %v248 = vld [vmem:[%s211 + $0x30] sm:$0xff]
        %v249 = vld [vmem:[%s211 + $0x38] sm:$0xff]
        %v250 = vld [vmem:[%s211 + $0x40] sm:$0xff]
        %v251 = vld [vmem:[%s211 + $0x48] sm:$0xff]
        %v252 = vld [vmem:[%s211 + $0x50] sm:$0xff]
        %v253 = vld [vmem:[%s211 + $0x58] sm:$0xff]
        %v254 = vld [vmem:[%s211 + $0x60] sm:$0xff]
        %v255 = vld [vmem:[%s211 + $0x68] sm:$0xff]
        %v256 = vld [vmem:[%s211 + $0x70] sm:$0xff]
        %v257 = vld [vmem:[%s211 + $0x78] sm:$0xff]
        %v258 = vld [vmem:[%s211 + $0x80] sm:$0xff]
        %v259 = vld [vmem:[%s211 + $0x88] sm:$0xff]
        %v260 = vld [vmem:[%s211 + $0x90] sm:$0xff]
        %v261 = vld [vmem:[%s211 + $0x98] sm:$0xff]
        %v262 = vld [vmem:[%s211 + $0xa0] sm:$0xff]
        %v263 = vld [vmem:[%s211 + $0xa8] sm:$0xff]
        %v264 = vld [vmem:[%s211 + $0xb0] sm:$0xff]
        %v265 = vld [vmem:[%s211 + $0xb8] sm:$0xff]
        %v266 = vld [vmem:[%s211 + $0xc0] sm:$0xff]
        %v267 = vld [vmem:[%s211 + $0xc8] sm:$0xff]
        %v268 = vld [vmem:[%s211 + $0xd0] sm:$0xff]
        %v269 = vld [vmem:[%s211 + $0xd8] sm:$0xff]
        %v270 = vld [vmem:[%s211 + $0xe0] sm:$0xff]
        %v271 = vld [vmem:[%s211 + $0xe8] sm:$0xff]
        %v272 = vld [vmem:[%s211 + $0xf0] sm:$0xff]
        %v273 = vld [vmem:[%s211 + $0xf8] sm:$0xff]
        %v274 = vld [vmem:[#allocation5] sm:$0xf]
        %v275 = vld [vmem:[#allocation5 + $0x4] sm:$0xf]
        %v276 = vld [vmem:[#allocation5 + $0x8] sm:$0xf]
        %v277 = vld [vmem:[#allocation5 + $0xc] sm:$0xf]
        %v278 = vld [vmem:[#allocation5 + $0x10] sm:$0xf]
        %v279 = vld [vmem:[#allocation5 + $0x14] sm:$0xf]
        %v280 = vld [vmem:[#allocation5 + $0x18] sm:$0xf]
        %v281 = vld [vmem:[#allocation5 + $0x1c] sm:$0xf]
        %v282 = vld [vmem:[#allocation5 + $0x20] sm:$0xf]
        %v283 = vld [vmem:[#allocation5 + $0x24] sm:$0xf]
        %v284 = vld [vmem:[#allocation5 + $0x28] sm:$0xf]
        %v285 = vld [vmem:[#allocation5 + $0x2c] sm:$0xf]
        %v286 = vld [vmem:[#allocation5 + $0x30] sm:$0xf]
        %v287 = vld [vmem:[#allocation5 + $0x34] sm:$0xf]
        %v288 = vld [vmem:[#allocation5 + $0x38] sm:$0xf]
        %v289 = vld [vmem:[#allocation5 + $0x3c] sm:$0xf]
        %v290 = vld [vmem:[#allocation5 + $0x40] sm:$0xf]
        %v291 = vld [vmem:[#allocation5 + $0x44] sm:$0xf]
        %v292 = vld [vmem:[#allocation5 + $0x48] sm:$0xf]
        %v293 = vld [vmem:[#allocation5 + $0x4c] sm:$0xf]
        %v294 = vld [vmem:[#allocation5 + $0x50] sm:$0xf]
        %v295 = vld [vmem:[#allocation5 + $0x54] sm:$0xf]
        %v296 = vld [vmem:[#allocation5 + $0x58] sm:$0xf]
        %v297 = vld [vmem:[#allocation5 + $0x5c] sm:$0xf]
        %v298 = vld [vmem:[#allocation5 + $0x60] sm:$0xf]
        %v299 = vld [vmem:[#allocation5 + $0x64] sm:$0xf]
        %v300 = vld [vmem:[#allocation5 + $0x68] sm:$0xf]
        %v301 = vld [vmem:[#allocation5 + $0x6c] sm:$0xf]
        %v302 = vld [vmem:[#allocation5 + $0x70] sm:$0xf]
        %v303 = vld [vmem:[#allocation5 + $0x74] sm:$0xf]
        %v304 = vld [vmem:[#allocation5 + $0x78] sm:$0xf]
        %v305 = vld [vmem:[#allocation5 + $0x7c] sm:$0xf]
        %v306 = vld [vmem:[%s2] sm:$0x1]
        %v308 = vperm.slane %v306, 0
        %v342 = vunpack.c.l.b16 %v242
        %v343 = vunpack.c.h.b16 %v242
        %v344 = vunpack.c.l.b16 %v243
        %v345 = vunpack.c.h.b16 %v243
        %v346 = vunpack.c.l.b16 %v244
        %v347 = vunpack.c.h.b16 %v244
        %v348 = vunpack.c.l.b16 %v245
        %v349 = vunpack.c.h.b16 %v245
        %v350 = vunpack.c.l.b16 %v246
        %v351 = vunpack.c.h.b16 %v246
        %v352 = vunpack.c.l.b16 %v247
        %v353 = vunpack.c.h.b16 %v247
        %v354 = vunpack.c.l.b16 %v248
        %v355 = vunpack.c.h.b16 %v248
        %v356 = vunpack.c.l.b16 %v249
        %v357 = vunpack.c.h.b16 %v249
        %v358 = vunpack.c.l.b16 %v250
        %v359 = vunpack.c.h.b16 %v250
        %v360 = vunpack.c.l.b16 %v251
        %v361 = vunpack.c.h.b16 %v251
        %v362 = vunpack.c.l.b16 %v252
        %v363 = vunpack.c.h.b16 %v252
        %v364 = vunpack.c.l.b16 %v253
        %v365 = vunpack.c.h.b16 %v253
        %v366 = vunpack.c.l.b16 %v254
        %v367 = vunpack.c.h.b16 %v254
        %v368 = vunpack.c.l.b16 %v255
        %v369 = vunpack.c.h.b16 %v255
        %v370 = vunpack.c.l.b16 %v256
        %v371 = vunpack.c.h.b16 %v256
        %v372 = vunpack.c.l.b16 %v257
        %v373 = vunpack.c.h.b16 %v257
        %v374 = vunpack.c.l.b16 %v258
        %v375 = vunpack.c.h.b16 %v258
        %v376 = vunpack.c.l.b16 %v259
        %v377 = vunpack.c.h.b16 %v259
        %v378 = vunpack.c.l.b16 %v260
        %v379 = vunpack.c.h.b16 %v260
        %v380 = vunpack.c.l.b16 %v261
        %v381 = vunpack.c.h.b16 %v261
        %v382 = vunpack.c.l.b16 %v262
        %v383 = vunpack.c.h.b16 %v262
        %v384 = vunpack.c.l.b16 %v263
        %v385 = vunpack.c.h.b16 %v263
        %v386 = vunpack.c.l.b16 %v264
        %v387 = vunpack.c.h.b16 %v264
        %v388 = vunpack.c.l.b16 %v265
        %v389 = vunpack.c.h.b16 %v265
        %v390 = vunpack.c.l.b16 %v266
        %v391 = vunpack.c.h.b16 %v266
        %v392 = vunpack.c.l.b16 %v267
        %v393 = vunpack.c.h.b16 %v267
        %v394 = vunpack.c.l.b16 %v268
        %v395 = vunpack.c.h.b16 %v268
        %v396 = vunpack.c.l.b16 %v269
        %v397 = vunpack.c.h.b16 %v269
        %v398 = vunpack.c.l.b16 %v270
        %v399 = vunpack.c.h.b16 %v270
        %v400 = vunpack.c.l.b16 %v271
        %v401 = vunpack.c.h.b16 %v271
        %v402 = vunpack.c.l.b16 %v272
        %v403 = vunpack.c.h.b16 %v272
        %v404 = vunpack.c.l.b16 %v273
        %v405 = vunpack.c.h.b16 %v273
        %v406 = vpack.c.b16 %v344, %v342
        %v407 = vpack.c.b16 %v345, %v343
        %v408 = vpack.c.b16 %v348, %v346
        %v409 = vpack.c.b16 %v349, %v347
        %v410 = vpack.c.b16 %v352, %v350
        %v411 = vpack.c.b16 %v353, %v351
        %v412 = vpack.c.b16 %v356, %v354
        %v413 = vpack.c.b16 %v357, %v355
        %v414 = vpack.c.b16 %v360, %v358
        %v415 = vpack.c.b16 %v361, %v359
        %v416 = vpack.c.b16 %v364, %v362
        %v417 = vpack.c.b16 %v365, %v363
        %v418 = vpack.c.b16 %v368, %v366
        %v419 = vpack.c.b16 %v369, %v367
        %v420 = vpack.c.b16 %v372, %v370
        %v421 = vpack.c.b16 %v373, %v371
        %v422 = vpack.c.b16 %v376, %v374
        %v423 = vpack.c.b16 %v377, %v375
        %v424 = vpack.c.b16 %v380, %v378
        %v425 = vpack.c.b16 %v381, %v379
        %v426 = vpack.c.b16 %v384, %v382
        %v427 = vpack.c.b16 %v385, %v383
        %v428 = vpack.c.b16 %v388, %v386
        %v429 = vpack.c.b16 %v389, %v387
        %v430 = vpack.c.b16 %v392, %v390
        %v431 = vpack.c.b16 %v393, %v391
        %v432 = vpack.c.b16 %v396, %v394
        %v433 = vpack.c.b16 %v397, %v395
        %v434 = vpack.c.b16 %v400, %v398
        %v435 = vpack.c.b16 %v401, %v399
        %v436 = vpack.c.b16 %v404, %v402
        %v437 = vpack.c.b16 %v405, %v403
        %v502 = vunpack.c.l.b16 %v274
        %v503 = vunpack.c.l.b16 %v275
        %v504 = vunpack.c.l.b16 %v276
        %v505 = vunpack.c.l.b16 %v277
        %v506 = vunpack.c.l.b16 %v278
        %v507 = vunpack.c.l.b16 %v279
        %v508 = vunpack.c.l.b16 %v280
        %v509 = vunpack.c.l.b16 %v281
        %v510 = vunpack.c.l.b16 %v282
        %v511 = vunpack.c.l.b16 %v283
        %v512 = vunpack.c.l.b16 %v284
        %v513 = vunpack.c.l.b16 %v285
        %v514 = vunpack.c.l.b16 %v286
        %v515 = vunpack.c.l.b16 %v287
        %v516 = vunpack.c.l.b16 %v288
        %v517 = vunpack.c.l.b16 %v289
        %v518 = vunpack.c.l.b16 %v290
        %v519 = vunpack.c.l.b16 %v291
        %v520 = vunpack.c.l.b16 %v292
        %v521 = vunpack.c.l.b16 %v293
        %v522 = vunpack.c.l.b16 %v294
        %v523 = vunpack.c.l.b16 %v295
        %v524 = vunpack.c.l.b16 %v296
        %v525 = vunpack.c.l.b16 %v297
        %v526 = vunpack.c.l.b16 %v298
        %v527 = vunpack.c.l.b16 %v299
        %v528 = vunpack.c.l.b16 %v300
        %v529 = vunpack.c.l.b16 %v301
        %v530 = vunpack.c.l.b16 %v302
        %v531 = vunpack.c.l.b16 %v303
        %v532 = vunpack.c.l.b16 %v304
        %v533 = vunpack.c.l.b16 %v305
        %v534 = vpack.c.b16 %v503, %v502
        %v535 = vpack.c.b16 %v505, %v504
        %v536 = vpack.c.b16 %v507, %v506
        %v537 = vpack.c.b16 %v509, %v508
        %v538 = vpack.c.b16 %v511, %v510
        %v539 = vpack.c.b16 %v513, %v512
        %v540 = vpack.c.b16 %v515, %v514
        %v541 = vpack.c.b16 %v517, %v516
        %v542 = vpack.c.b16 %v519, %v518
        %v543 = vpack.c.b16 %v521, %v520
        %v544 = vpack.c.b16 %v523, %v522
        %v545 = vpack.c.b16 %v525, %v524
        %v546 = vpack.c.b16 %v527, %v526
        %v547 = vpack.c.b16 %v529, %v528
        %v548 = vpack.c.b16 %v531, %v530
        %v549 = vpack.c.b16 %v533, %v532
        %566 = vmatpush.bf16.msra.mxu0 %v541
        %567 = vmatpush.bf16.msra.mxu0 %v540
        %568 = vmatpush.bf16.msra.mxu0 %v539
        %569 = vmatpush.bf16.msra.mxu0 %v538
        %570 = vmatpush.bf16.msra.mxu0 %v537
        %571 = vmatpush.bf16.msra.mxu0 %v536
        %572 = vmatpush.bf16.msra.mxu0 %v535
        %573 = vmatpush.bf16.msra.mxu0 %v534
        %574 = vmatmul.bf16.gmra.mxu0 %v406
        %v575 = vpop.f32.mrf.mxu0
        %v576 = vadd.f32 %v308, %v575
        %v577 = vpop.f32.mrf.mxu0
        %v578 = vadd.f32 %v308, %v577
        %579 = vmatmul.bf16.gmra.mxu0 %v408
        %v580 = vpop.f32.mrf.mxu0
        %v581 = vadd.f32 %v308, %v580
        %v582 = vpop.f32.mrf.mxu0
        %v583 = vadd.f32 %v308, %v582
        %584 = vmatmul.bf16.gmra.mxu0 %v410
        %v585 = vpop.f32.mrf.mxu0
        %v586 = vadd.f32 %v308, %v585
        %v587 = vpop.f32.mrf.mxu0
        %v588 = vadd.f32 %v308, %v587
        %589 = vmatmul.bf16.gmra.mxu0 %v412
        %v590 = vpop.f32.mrf.mxu0
        %v591 = vadd.f32 %v308, %v590
        %v592 = vpop.f32.mrf.mxu0
        %v593 = vadd.f32 %v308, %v592
        %594 = vmatmul.bf16.gmra.mxu0 %v414
        %v595 = vpop.f32.mrf.mxu0
        %v596 = vadd.f32 %v308, %v595
        %v597 = vpop.f32.mrf.mxu0
        %v598 = vadd.f32 %v308, %v597
        %599 = vmatmul.bf16.gmra.mxu0 %v416
        %v600 = vpop.f32.mrf.mxu0
        %v601 = vadd.f32 %v308, %v600
        %v602 = vpop.f32.mrf.mxu0
        %v603 = vadd.f32 %v308, %v602
        %604 = vmatmul.bf16.gmra.mxu0 %v418
        %v605 = vpop.f32.mrf.mxu0
        %v606 = vadd.f32 %v308, %v605
        %v607 = vpop.f32.mrf.mxu0
        %v608 = vadd.f32 %v308, %v607
        %609 = vmatmul.bf16.gmra.mxu0 %v420
        %v610 = vpop.f32.mrf.mxu0
        %v611 = vadd.f32 %v308, %v610
        %v612 = vpop.f32.mrf.mxu0
        %v613 = vadd.f32 %v308, %v612
        %614 = vmatmul.bf16.gmra.mxu0 %v422
        %v615 = vpop.f32.mrf.mxu0
        %v616 = vadd.f32 %v308, %v615
        %v617 = vpop.f32.mrf.mxu0
        %v618 = vadd.f32 %v308, %v617
        %619 = vmatmul.bf16.gmra.mxu0 %v424
        %v620 = vpop.f32.mrf.mxu0
        %v621 = vadd.f32 %v308, %v620
        %v622 = vpop.f32.mrf.mxu0
        %v623 = vadd.f32 %v308, %v622
        %624 = vmatmul.bf16.gmra.mxu0 %v426
        %v625 = vpop.f32.mrf.mxu0
        %v626 = vadd.f32 %v308, %v625
        %v627 = vpop.f32.mrf.mxu0
        %v628 = vadd.f32 %v308, %v627
        %629 = vmatmul.bf16.gmra.mxu0 %v428
        %v630 = vpop.f32.mrf.mxu0
        %v631 = vadd.f32 %v308, %v630
        %v632 = vpop.f32.mrf.mxu0
        %v633 = vadd.f32 %v308, %v632
        %634 = vmatmul.bf16.gmra.mxu0 %v430
        %v635 = vpop.f32.mrf.mxu0
        %v636 = vadd.f32 %v308, %v635
        %v637 = vpop.f32.mrf.mxu0
        %v638 = vadd.f32 %v308, %v637
        %639 = vmatmul.bf16.gmra.mxu0 %v432
        %v640 = vpop.f32.mrf.mxu0
        %v641 = vadd.f32 %v308, %v640
        %v642 = vpop.f32.mrf.mxu0
        %v643 = vadd.f32 %v308, %v642
        %644 = vmatmul.bf16.gmra.mxu0 %v434
        %v645 = vpop.f32.mrf.mxu0
        %v646 = vadd.f32 %v308, %v645
        %v647 = vpop.f32.mrf.mxu0
        %v648 = vadd.f32 %v308, %v647
        %649 = vmatmul.bf16.gmra.mxu0 %v436
        %v650 = vpop.f32.mrf.mxu0
        %v651 = vadd.f32 %v308, %v650
        %v652 = vpop.f32.mrf.mxu0
        %v653 = vadd.f32 %v308, %v652
        %654 = vdwg.mxu0
        %655 = vmatpush.bf16.msra.mxu0 %v549
        %656 = vmatpush.bf16.msra.mxu0 %v548
        %657 = vmatpush.bf16.msra.mxu0 %v547
        %658 = vmatpush.bf16.msra.mxu0 %v546
        %659 = vmatpush.bf16.msra.mxu0 %v545
        %660 = vmatpush.bf16.msra.mxu0 %v544
        %661 = vmatpush.bf16.msra.mxu0 %v543
        %662 = vmatpush.bf16.msra.mxu0 %v542
        %663 = vmatmul.bf16.gmra.mxu0 %v407
        %v664 = vpop.f32.mrf.mxu0
        %v665 = vadd.f32 %v576, %v664
        %v666 = vpop.f32.mrf.mxu0
        %v667 = vadd.f32 %v578, %v666
        %668 = vmatmul.bf16.gmra.mxu0 %v409
        %v669 = vpop.f32.mrf.mxu0
        %v670 = vadd.f32 %v581, %v669
        %v671 = vpop.f32.mrf.mxu0
        %v672 = vadd.f32 %v583, %v671
        %673 = vmatmul.bf16.gmra.mxu0 %v411
        %v674 = vpop.f32.mrf.mxu0
        %v675 = vadd.f32 %v586, %v674
        %v676 = vpop.f32.mrf.mxu0
        %v677 = vadd.f32 %v588, %v676
        %678 = vmatmul.bf16.gmra.mxu0 %v413
        %v679 = vpop.f32.mrf.mxu0
        %v680 = vadd.f32 %v591, %v679
        %v681 = vpop.f32.mrf.mxu0
        %v682 = vadd.f32 %v593, %v681
        %683 = vmatmul.bf16.gmra.mxu0 %v415
        %v684 = vpop.f32.mrf.mxu0
        %v685 = vadd.f32 %v596, %v684
        %v686 = vpop.f32.mrf.mxu0
        %v687 = vadd.f32 %v598, %v686
        %688 = vmatmul.bf16.gmra.mxu0 %v417
        %v689 = vpop.f32.mrf.mxu0
        %v690 = vadd.f32 %v601, %v689
        %v691 = vpop.f32.mrf.mxu0
        %v692 = vadd.f32 %v603, %v691
        %693 = vmatmul.bf16.gmra.mxu0 %v419
        %v694 = vpop.f32.mrf.mxu0
        %v695 = vadd.f32 %v606, %v694
        %v696 = vpop.f32.mrf.mxu0
        %v697 = vadd.f32 %v608, %v696
        %698 = vmatmul.bf16.gmra.mxu0 %v421
        %v699 = vpop.f32.mrf.mxu0
        %v700 = vadd.f32 %v611, %v699
        %v701 = vpop.f32.mrf.mxu0
        %v702 = vadd.f32 %v613, %v701
        %703 = vmatmul.bf16.gmra.mxu0 %v423
        %v704 = vpop.f32.mrf.mxu0
        %v705 = vadd.f32 %v616, %v704
        %v706 = vpop.f32.mrf.mxu0
        %v707 = vadd.f32 %v618, %v706
        %708 = vmatmul.bf16.gmra.mxu0 %v425
        %v709 = vpop.f32.mrf.mxu0
        %v710 = vadd.f32 %v621, %v709
        %v711 = vpop.f32.mrf.mxu0
        %v712 = vadd.f32 %v623, %v711
        %713 = vmatmul.bf16.gmra.mxu0 %v427
        %v714 = vpop.f32.mrf.mxu0
        %v715 = vadd.f32 %v626, %v714
        %v716 = vpop.f32.mrf.mxu0
        %v717 = vadd.f32 %v628, %v716
        %718 = vmatmul.bf16.gmra.mxu0 %v429
        %v719 = vpop.f32.mrf.mxu0
        %v720 = vadd.f32 %v631, %v719
        %v721 = vpop.f32.mrf.mxu0
        %v722 = vadd.f32 %v633, %v721
        %723 = vmatmul.bf16.gmra.mxu0 %v431
        %v724 = vpop.f32.mrf.mxu0
        %v725 = vadd.f32 %v636, %v724
        %v726 = vpop.f32.mrf.mxu0
        %v727 = vadd.f32 %v638, %v726
        %728 = vmatmul.bf16.gmra.mxu0 %v433
        %v729 = vpop.f32.mrf.mxu0
        %v730 = vadd.f32 %v641, %v729
        %v731 = vpop.f32.mrf.mxu0
        %v732 = vadd.f32 %v643, %v731
        %733 = vmatmul.bf16.gmra.mxu0 %v435
        %v734 = vpop.f32.mrf.mxu0
        %v735 = vadd.f32 %v646, %v734
        %v736 = vpop.f32.mrf.mxu0
        %v737 = vadd.f32 %v648, %v736
        %738 = vmatmul.bf16.gmra.mxu0 %v437
        %v739 = vpop.f32.mrf.mxu0
        %v740 = vadd.f32 %v651, %v739
        %v741 = vpop.f32.mrf.mxu0
        %v742 = vadd.f32 %v653, %v741
        %743 = vdwg.mxu0
        %744 = vst [vmem:[%s239] sm:$0xff] %v665
        %745 = vst [vmem:[%s239 + $0x8] sm:$0xff] %v667
        %746 = vst [vmem:[%s239 + $0x10] sm:$0xff] %v670
        %747 = vst [vmem:[%s239 + $0x18] sm:$0xff] %v672
        %748 = vst [vmem:[%s239 + $0x20] sm:$0xff] %v675
        %749 = vst [vmem:[%s239 + $0x28] sm:$0xff] %v677
        %750 = vst [vmem:[%s239 + $0x30] sm:$0xff] %v680
        %751 = vst [vmem:[%s239 + $0x38] sm:$0xff] %v682
        %752 = vst [vmem:[%s239 + $0x40] sm:$0xff] %v685
        %753 = vst [vmem:[%s239 + $0x48] sm:$0xff] %v687
        %754 = vst [vmem:[%s239 + $0x50] sm:$0xff] %v690
        %755 = vst [vmem:[%s239 + $0x58] sm:$0xff] %v692
        %756 = vst [vmem:[%s239 + $0x60] sm:$0xff] %v695
        %757 = vst [vmem:[%s239 + $0x68] sm:$0xff] %v697
        %758 = vst [vmem:[%s239 + $0x70] sm:$0xff] %v700
        %759 = vst [vmem:[%s239 + $0x78] sm:$0xff] %v702
        %760 = vst [vmem:[%s239 + $0x80] sm:$0xff] %v705
        %761 = vst [vmem:[%s239 + $0x88] sm:$0xff] %v707
        %762 = vst [vmem:[%s239 + $0x90] sm:$0xff] %v710
        %763 = vst [vmem:[%s239 + $0x98] sm:$0xff] %v712
        %764 = vst [vmem:[%s239 + $0xa0] sm:$0xff] %v715
        %765 = vst [vmem:[%s239 + $0xa8] sm:$0xff] %v717
        %766 = vst [vmem:[%s239 + $0xb0] sm:$0xff] %v720
        %767 = vst [vmem:[%s239 + $0xb8] sm:$0xff] %v722
        %768 = vst [vmem:[%s239 + $0xc0] sm:$0xff] %v725
        %769 = vst [vmem:[%s239 + $0xc8] sm:$0xff] %v727
        %770 = vst [vmem:[%s239 + $0xd0] sm:$0xff] %v730
        %771 = vst [vmem:[%s239 + $0xd8] sm:$0xff] %v732
        %772 = vst [vmem:[%s239 + $0xe0] sm:$0xff] %v735
        %773 = vst [vmem:[%s239 + $0xe8] sm:$0xff] %v737
        %774 = vst [vmem:[%s239 + $0xf0] sm:$0xff] %v740
        %775 = vst [vmem:[%s239 + $0xf8] sm:$0xff] %v742
        %s776 = sand.u32 %s124, 1
        %s777 = scalar_lea.sflag [#allocation4], %s776
        %s778 = sand.u32 %s124, 1
        %s779 = smul.addr %s778, 256
        %s780 = scalar_lea.vmem [#allocation7], %s779
        // Predicated region
        $region41: #{tpu_custom_call.1} parent=31 // pred_check
          %p781 = pneg %p134
        $region42: #{tpu_custom_call.1} parent=31 // pred_check_branch
          %783 = sbr.rel (%p781) target = $region44
        $region43: #{tpu_custom_call.1} parent=31 // pred_region
          %s784 = smul.u32 32, %s28
          %786 = vsyncadd %s777, 0
          %s787 = smul.addr %s27, 32
          %s788 = sadd.s32 %s784, %s787
          %s789 = smul.addr %s26, 64
          %s790 = sadd.s32 %s788, %s789
          %s791 = smul.addr %s790, 8
          %s792 = scalar_lea.hbm %s3, %s791
          %s793 = sshll.u32 %s780, 4
          %s794 = int_to_ptr.vmem [resolvable:$true] %s793
          %s795 = sshll.u32 %s792, 4
          %s796 = int_to_ptr.hbm [resolvable:$true] %s795
          %801 = dma.vmem_to_hbm [thread:$0]  %s794, 4096, %s796, %s777, 128, 128, 8
        $region44: #{tpu_custom_call.1} parent=31 // pred_fallthru
          _
      $region32: #{tpu_custom_call.1} parent=5 // pred_fallthru
        _
      %p802 = scmp.le.s32.totalorder 2, %s16
      // Predicated region
      $region45: #{tpu_custom_call.1} parent=5 // pred_check
        %p803 = pneg %p802
      $region46: #{tpu_custom_call.1} parent=5 // pred_check_branch
        %805 = sbr.rel (%p803) target = $region48
      $region47: #{tpu_custom_call.1} parent=5 // pred_region
        %s806 = ssub.s32 %s16, 2
        // Predicated region
        $region49: #{tpu_custom_call.1} parent=47 // pred_check
          %p807 = pneg %p140
        $region50: #{tpu_custom_call.1} parent=47 // pred_check_branch
          %809 = sbr.rel (%p807) target = $region52
        $region51: #{tpu_custom_call.1} parent=47 // pred_region
          %s810 = sand.u32 %s125, 1
          %s811 = scalar_lea.sflag [#allocation4], %s810
          %s812 = sand.u32 %s125, 1
          %s813 = smul.addr %s812, 256
          %s814 = scalar_lea.vmem [#allocation7], %s813
          %816 = dma.done %s811, 4096
        $region52: #{tpu_custom_call.1} parent=47 // pred_fallthru
          _
      $region48: #{tpu_custom_call.1} parent=5 // pred_fallthru
        _
    $region6: #{tpu_custom_call.1} parent=1 // loop_footer
      %s20 = sadd.s32 1, %s16
    $region7: #{tpu_custom_call.1} parent=1 // loop_footer_branch
      %15 = sbr.rel target = $region3
    $region8: #{tpu_custom_call.1} parent=1 // loop_exit
      _
    %817 = vsyncpa [#allocation3], 1
    %s818 = scalar_lea.sflag [#allocation3], 1
    %819 = vsyncpa %s818, 1
    %820 = vsyncpa [#allocation6], 1
    %821 = vsyncpa [#allocation4], 1
    %s822 = scalar_lea.sflag [#allocation4], 1
    %823 = vsyncpa %s822, 1

</llo_original>
